<compile_context>
chip_gen: v7x
topology: tpu7x:2x2x1
jax: 0.10.0
libtpu: 0.0.40
codegen_flags: <defaults>
</compile_context>

<pallas_src>
import functools

import jax
import jax.numpy as jnp
from jax.experimental import pallas as pl
from jax.experimental.pallas import tpu as pltpu


def _cross_attention_kernel(q_ref, kv_ref, wn_ref,
                            wq_ref, wk_ref, wv_ref, wo_ref,
                            bqkv_ref, bo_ref,
                            o_ref,
                            xn_ref, k_cache, v_cache, acc_ref,
                            *, eps):
    t = pl.program_id(1)
    h = pl.program_id(2)
    n_heads = pl.num_programs(2)

    # --- once per (batch, q-tile): RMSNorm(q) in f32, cache bf16; zero acc ---
    @pl.when(h == 0)
    def _init():
        x = q_ref[0].astype(jnp.float32)                        # (tq, H)
        ms = jnp.mean(x * x, axis=-1, keepdims=True)
        xn = x * jax.lax.rsqrt(ms + eps) * wn_ref[...]
        xn_ref[...] = xn.astype(jnp.bfloat16)
        acc_ref[...] = jnp.zeros_like(acc_ref)

    bias = bqkv_ref[h]                                          # (3, hd) f32

    # --- once per (batch, head): project K/V and cache across all q-tiles ---
    @pl.when(t == 0)
    def _fill_kv():
        kv = kv_ref[0]                                          # (Skv, H) bf16
        kh = jnp.dot(kv, wk_ref[h], preferred_element_type=jnp.float32) + bias[1:2, :]
        vh = jnp.dot(kv, wv_ref[h], preferred_element_type=jnp.float32) + bias[2:3, :]
        k_cache[h] = kh.astype(jnp.bfloat16)
        v_cache[h] = vh.astype(jnp.bfloat16)

    # --- per-head Q projection (1/sqrt(hd) pre-folded into w_q / b_q) -------
    xn = xn_ref[...]                                            # (tq, H) bf16
    qh = (jnp.dot(xn, wq_ref[h], preferred_element_type=jnp.float32)
          + bias[0:1, :]).astype(jnp.bfloat16)                  # (tq, hd)

    kh = k_cache[h]                                             # (Skv, hd) bf16
    vh = v_cache[h]

    # --- scores: contract last axes of q and k (no explicit transpose) ------
    s = jax.lax.dot_general(
        qh, kh, dimension_numbers=(((1,), (1,)), ((), ())),
        preferred_element_type=jnp.float32)                     # (tq, Skv) f32

    # --- stable softmax with DEFERRED normalization --------------------------
    m = jnp.max(s, axis=-1, keepdims=True)
    p = jnp.exp(s - m)
    l = jnp.sum(p, axis=-1, keepdims=True)                      # (tq, 1)
    ah = jnp.dot(p.astype(jnp.bfloat16), vh,
                 preferred_element_type=jnp.float32)            # (tq, hd)
    ah = ah * pl.reciprocal(l, approx=True)

    # --- accumulate this head's slice of the output projection --------------
    acc_ref[...] += jnp.dot(ah.astype(jnp.bfloat16), wo_ref[h],
                            preferred_element_type=jnp.float32)  # (tq, H)

    @pl.when(h == n_heads - 1)
    def _finalize():
        o_ref[...] = (acc_ref[...] + bo_ref[...])[None].astype(o_ref.dtype)


def _pick_q_tile(sq):
    # Capped at 256: bigger q-tiles buy little once lane-dense, and keep the
    # double-buffered q/out blocks comfortable on the 64 MiB-VMEM generation.
    for cand in (256, 128):
        if sq % cand == 0:
            return cand
    return sq   # full-extent block (always legal)


def _round_up(n, m):
    return ((n + m - 1) // m) * m


def _vreg_tile_bytes(shape, dtype):
    """VMEM footprint of a buffer including (sublane, lane) layout padding."""
    itemsize = jnp.dtype(dtype).itemsize
    shape = tuple(shape)
    if len(shape) == 1:
        shape = (1,) + shape
    lead = 1
    for d in shape[:-2]:
        lead *= d
    sub_mult = 8 * max(1, 4 // itemsize)          # 8 rows f32, 16 rows bf16
    return lead * _round_up(shape[-2], sub_mult) * _round_up(shape[-1], 128) * itemsize


def _vmem_capacity_bytes():
    try:
        return int(pltpu.get_tpu_info().vmem_capacity_bytes)
    except Exception:
        return 64 * 1024 * 1024   # conservative (v7x-sized) fallback


def cross_attention(q, kv, params, num_heads, eps=1e-5):
    B, Sq, H = q.shape
    _, Skv, _ = kv.shape
    assert H % num_heads == 0
    hd = H // num_heads
    scale = 1.0 / (hd ** 0.5)

    tq = _pick_q_tile(Sq)
    n_qt = Sq // tq

    out_dtype = q.dtype
    wdt = jnp.bfloat16

    # Pre-cast kv once in the wrapper (item 3): halves its HBM read and its
    # resident VMEM block, removes the per-head in-kernel cast.
    kv_bf = kv.astype(wdt)

    def per_head_cols(w2d):  # (H_in, H_out) -> (heads, H_in, hd), head-major cols
        return jnp.transpose(w2d.reshape(H, num_heads, hd), (1, 0, 2))

    wqT = params["w_q"].astype(jnp.float32).T            # (H, H)
    wkvT = params["w_kv"].astype(jnp.float32).T          # (H, 2H): [:, :H]=K, [:, H:]=V
    woutT = params["w_out"].astype(jnp.float32).T        # (H, H)

    # 1/sqrt(hd) folded into the q projection (weight and bias).
    wq3 = (per_head_cols(wqT) * scale).astype(wdt)       # (heads, H, hd)
    wk3 = per_head_cols(wkvT[:, :H]).astype(wdt)
    wv3 = per_head_cols(wkvT[:, H:]).astype(wdt)
    wo3 = woutT.reshape(num_heads, hd, H).astype(wdt)    # (heads, hd, H)

    # Coalesced per-head biases (item 7): row 0 = q (pre-scaled), 1 = k, 2 = v.
    bq = params["b_q"].astype(jnp.float32).reshape(num_heads, hd) * scale
    bk = params["b_kv"][:H].astype(jnp.float32).reshape(num_heads, hd)
    bv = params["b_kv"][H:].astype(jnp.float32).reshape(num_heads, hd)
    bqkv = jnp.stack([bq, bk, bv], axis=1)               # (heads, 3, hd)
    bout = params["b_out"].astype(jnp.float32).reshape(1, H)
    wn = params["w_norm"].astype(jnp.float32).reshape(1, H)

    kernel = functools.partial(_cross_attention_kernel, eps=eps)

    # --- cost estimate (KV projection once per batch, weights read once) -----
    flops = (2 * B * Sq * H * H                  # q projection
             + 2 * B * Skv * H * 2 * H           # kv projection (cached: once)
             + 4 * B * Sq * Skv * H              # scores + PV over all heads
             + 2 * B * Sq * H * H)               # out projection
    bytes_accessed = (q.size * q.dtype.itemsize                   # q read once
                      + kv_bf.size * 2                            # kv bf16, once/batch
                      + B * Sq * H * jnp.dtype(out_dtype).itemsize  # output
                      + 4 * H * H * 2                             # weights, once
                      + (3 * H + 2 * H) * 4)                      # biases + norm
    cost = pl.CostEstimate(flops=flops,
                           transcendentals=B * num_heads * Sq * Skv,
                           bytes_accessed=bytes_accessed)

    # --- VMEM budget: pipelined blocks (x2) + resident weights + scratch -----
    vmem_needed = (
        2 * _vreg_tile_bytes((tq, H), q.dtype)                # q block
        + 2 * _vreg_tile_bytes((Skv, H), wdt)                 # kv block
        + 2 * _vreg_tile_bytes((tq, H), out_dtype)            # out block
        + 2 * sum(_vreg_tile_bytes(w.shape, wdt) for w in (wq3, wk3, wv3, wo3))
        + _vreg_tile_bytes(bqkv.shape, jnp.float32)
        + 2 * _vreg_tile_bytes((1, H), jnp.float32)           # b_out, w_norm
        + _vreg_tile_bytes((tq, H), wdt)                      # xn scratch
        + 2 * _vreg_tile_bytes((num_heads, Skv, hd), wdt)     # K/V caches
        + _vreg_tile_bytes((tq, H), jnp.float32))             # accumulator
    vmem_limit = int(min(_vmem_capacity_bytes() * 9 // 10,
                         max(32 * 1024 * 1024, 2 * vmem_needed)))

    grid_spec = pltpu.PrefetchScalarGridSpec(
        num_scalar_prefetch=0,
        grid=(B, n_qt, num_heads),
        in_specs=[
            pl.BlockSpec((1, tq, H), lambda b, t, h: (b, t, 0)),          # q
            pl.BlockSpec((1, Skv, H), lambda b, t, h: (b, 0, 0)),         # kv bf16
            pl.BlockSpec((1, H), lambda b, t, h: (0, 0)),                 # w_norm
            pl.BlockSpec((num_heads, H, hd), lambda b, t, h: (0, 0, 0)),  # w_q  resident
            pl.BlockSpec((num_heads, H, hd), lambda b, t, h: (0, 0, 0)),  # w_k  resident
            pl.BlockSpec((num_heads, H, hd), lambda b, t, h: (0, 0, 0)),  # w_v  resident
            pl.BlockSpec((num_heads, hd, H), lambda b, t, h: (0, 0, 0)),  # w_out resident
            pl.BlockSpec((num_heads, 3, hd), lambda b, t, h: (0, 0, 0)),  # b_q/k/v
            pl.BlockSpec((1, H), lambda b, t, h: (0, 0)),                 # b_out
        ],
        out_specs=pl.BlockSpec((1, tq, H), lambda b, t, h: (b, t, 0)),
        scratch_shapes=[
            pltpu.VMEM((tq, H), jnp.bfloat16),                # cached RMSNorm(q)
            pltpu.VMEM((num_heads, Skv, hd), jnp.bfloat16),   # K cache (per batch)
            pltpu.VMEM((num_heads, Skv, hd), jnp.bfloat16),   # V cache (per batch)
            pltpu.VMEM((tq, H), jnp.float32),                 # out-proj accumulator
        ],
    )

    return pl.pallas_call(
        kernel,
        out_shape=jax.ShapeDtypeStruct((B, Sq, H), out_dtype),
        grid_spec=grid_spec,
        compiler_params=pltpu.CompilerParams(
            # B is megacore-parallel; the q-tile axis must stay sequential so
            # the t==0-filled K/V cache is valid, and the head axis accumulates.
            dimension_semantics=("parallel", "arbitrary", "arbitrary"),
            vmem_limit_bytes=vmem_limit),
        cost_estimate=cost,
    )(q, kv_bf, wn, wq3, wk3, wv3, wo3, bqkv, bout)


def reference(q, kv, params, num_heads, eps=1e-5):
    """Pure-JAX f32 reference matching the PyTorch forward (eval mode)."""
    B, Sq, H = q.shape
    hd = H // num_heads
    ms = jnp.mean(q * q, axis=-1, keepdims=True)
    xn = q * jax.lax.rsqrt(ms + eps) * params["w_norm"]
    qp = xn @ params["w_q"].T + params["b_q"]
    kvp = kv @ params["w_kv"].T + params["b_kv"]
    k, v = kvp[..., :H], kvp[..., H:]

    def split(x):
        b, s, _ = x.shape
        return x.reshape(b, s, num_heads, hd).transpose(0, 2, 1, 3)

    qh, kh, vh = split(qp), split(k), split(v)
    s = jnp.einsum("bhqd,bhkd->bhqk", qh, kh) / jnp.sqrt(jnp.float32(hd))
    p = jax.nn.softmax(s, axis=-1)
    o = jnp.einsum("bhqk,bhkd->bhqd", p, vh)
    o = o.transpose(0, 2, 1, 3).reshape(B, Sq, H)
    return o @ params["w_out"].T + params["b_out"]


def init_params(key, hidden):
    """Deterministic synthetic init (mirrors shapes of CrossAttention.__init__)."""
    ks = jax.random.split(key, 7)
    std = 0.02
    w_q = std * jax.random.truncated_normal(ks[0], -2.0, 2.0, (hidden, hidden), jnp.float32)
    w_kv = std * jax.random.truncated_normal(ks[1], -2.0, 2.0, (2 * hidden, hidden), jnp.float32)
    bound = 1.0 / (hidden ** 0.5)
    w_out = jax.random.uniform(ks[2], (hidden, hidden), jnp.float32, -bound, bound)
    b_q = jax.random.uniform(ks[3], (hidden,), jnp.float32, -bound, bound)
    b_kv = jax.random.uniform(ks[4], (2 * hidden,), jnp.float32, -bound, bound)
    b_out = jax.random.uniform(ks[5], (hidden,), jnp.float32, -bound, bound)
    w_norm = jnp.ones((hidden,), jnp.float32)
    return dict(w_q=w_q, b_q=b_q, w_kv=w_kv, b_kv=b_kv,
                w_out=w_out, b_out=b_out, w_norm=w_norm)


if __name__ == "__main__":
    B, Sq, Skv, hidden, num_heads = 2, 8, 16, 32, 4
    eps = 1e-5

    key = jax.random.PRNGKey(0)
    k_q, k_kv, k_p = jax.random.split(key, 3)
    q = jax.random.normal(k_q, (B, Sq, hidden), jnp.float32)
    kv = jax.random.normal(k_kv, (B, Skv, hidden), jnp.float32)
    params = init_params(k_p, hidden)

    out = cross_attention(q, kv, params, num_heads, eps)
    out = jax.block_until_ready(out)

    ref = reference(q, kv, params, num_heads, eps)
    assert out.shape == (B, Sq, hidden)
    # bf16 matmul operands (f32 accumulation) -> slightly looser tolerance.
    max_err = jnp.max(jnp.abs(out - ref))
    assert jnp.allclose(out, ref, rtol=3e-2, atol=3e-2), f"max abs err {max_err}"

    print("KERNEL_OK")
</pallas_src>

<mosaic_0001>
module attributes {stable_mosaic.version = 11 : i64} {
  func.func @_cross_attention_kernel(%arg0: i32, %arg1: i32, %arg2: i32, %arg3: memref<1x8x32xf32, #tpu.memory_space<vmem>>, %arg4: memref<1x16x32xbf16, #tpu.memory_space<vmem>>, %arg5: memref<1x32xf32, #tpu.memory_space<vmem>>, %arg6: memref<4x32x8xbf16, #tpu.memory_space<vmem>>, %arg7: memref<4x32x8xbf16, #tpu.memory_space<vmem>>, %arg8: memref<4x32x8xbf16, #tpu.memory_space<vmem>>, %arg9: memref<4x8x32xbf16, #tpu.memory_space<vmem>>, %arg10: memref<4x3x8xf32, #tpu.memory_space<vmem>>, %arg11: memref<1x32xf32, #tpu.memory_space<vmem>>, %arg12: memref<1x8x32xf32, #tpu.memory_space<vmem>>, %arg13: memref<8x32xbf16, #tpu.memory_space<vmem>>, %arg14: memref<4x16x8xbf16, #tpu.memory_space<vmem>>, %arg15: memref<4x16x8xbf16, #tpu.memory_space<vmem>>, %arg16: memref<8x32xf32, #tpu.memory_space<vmem>>) attributes {dimension_semantics = [#tpu.dimension_semantics<parallel>, #tpu.dimension_semantics<arbitrary>, #tpu.dimension_semantics<arbitrary>], iteration_bounds = array<i64: 2, 1, 4>, scalar_prefetch = 0 : i64, scratch_operands = 4 : i64, tpu.core_type = #tpu.core_type<tc>, window_params = [{transform_indices = @transform_0, window_bounds = array<i64: 1, 8, 32>}, {transform_indices = @transform_1, window_bounds = array<i64: 1, 16, 32>}, {pipeline_mode = #tpu.pipeline_mode<synchronous>, transform_indices = @transform_2, window_bounds = array<i64: 1, 32>}, {pipeline_mode = #tpu.pipeline_mode<synchronous>, transform_indices = @transform_3, window_bounds = array<i64: 4, 32, 8>}, {pipeline_mode = #tpu.pipeline_mode<synchronous>, transform_indices = @transform_4, window_bounds = array<i64: 4, 32, 8>}, {pipeline_mode = #tpu.pipeline_mode<synchronous>, transform_indices = @transform_5, window_bounds = array<i64: 4, 32, 8>}, {pipeline_mode = #tpu.pipeline_mode<synchronous>, transform_indices = @transform_6, window_bounds = array<i64: 4, 8, 32>}, {pipeline_mode = #tpu.pipeline_mode<synchronous>, transform_indices = @transform_7, window_bounds = array<i64: 4, 3, 8>}, {pipeline_mode = #tpu.pipeline_mode<synchronous>, transform_indices = @transform_8, window_bounds = array<i64: 1, 32>}, {transform_indices = @transform_9, window_bounds = array<i64: 1, 8, 32>}]} {
    %c0_i32 = arith.constant 0 : i32
    %0 = arith.cmpi eq, %arg2, %c0_i32 : i32
    %1 = arith.extui %0 : i1 to i32
    %c0_i32_0 = arith.constant 0 : i32
    %2 = arith.cmpi ne, %1, %c0_i32_0 : i32
    scf.if %2 {
      %c0_24 = arith.constant 0 : index
      %c0_25 = arith.constant 0 : index
      %c0_26 = arith.constant 0 : index
      %48 = vector.load %arg3[%c0_24, %c0_25, %c0_26] : memref<1x8x32xf32, #tpu.memory_space<vmem>>, vector<1x8x32xf32>
      %49 = vector.shape_cast %48 : vector<1x8x32xf32> to vector<8x32xf32>
      %50 = arith.mulf %49, %49 : vector<8x32xf32>
      %cst_27 = arith.constant dense<0.000000e+00> : vector<8xf32>
      %51 = vector.multi_reduction <add>, %50, %cst_27 [1] : vector<8x32xf32> to vector<8xf32>
      %52 = vector.shape_cast %51 : vector<8xf32> to vector<8x1xf32>
      %cst_28 = arith.constant 3.200000e+01 : f32
      %53 = vector.broadcast %cst_28 : f32 to vector<8x1xf32>
      %54 = arith.divf %52, %53 : vector<8x1xf32>
      %cst_29 = arith.constant 9.99999974E-6 : f32
      %55 = vector.broadcast %cst_29 : f32 to vector<8x1xf32>
      %56 = arith.addf %54, %55 : vector<8x1xf32>
      %57 = math.rsqrt %56 : vector<8x1xf32>
      %58 = vector.broadcast %57 : vector<8x1xf32> to vector<8x32xf32>
      %59 = arith.mulf %49, %58 : vector<8x32xf32>
      %c0_30 = arith.constant 0 : index
      %c0_31 = arith.constant 0 : index
      %60 = vector.load %arg5[%c0_30, %c0_31] : memref<1x32xf32, #tpu.memory_space<vmem>>, vector<1x32xf32>
      %61 = vector.broadcast %60 : vector<1x32xf32> to vector<8x32xf32>
      %62 = arith.mulf %59, %61 : vector<8x32xf32>
      %63 = arith.truncf %62 : vector<8x32xf32> to vector<8x32xbf16>
      %c0_32 = arith.constant 0 : index
      %c0_33 = arith.constant 0 : index
      %64 = vector.load %arg13[%c0_32, %c0_33] : memref<8x32xbf16, #tpu.memory_space<vmem>>, vector<8x32xbf16>
      tpu.vector_store %arg13[%c0_32, %c0_33], %63 {strides = array<i32>} : memref<8x32xbf16, #tpu.memory_space<vmem>>, vector<8x32xbf16>,
      %cst_34 = arith.constant 0.000000e+00 : f32
      %65 = vector.broadcast %cst_34 : f32 to vector<8x32xf32>
      %c0_35 = arith.constant 0 : index
      %c0_36 = arith.constant 0 : index
      %66 = vector.load %arg16[%c0_35, %c0_36] : memref<8x32xf32, #tpu.memory_space<vmem>>, vector<8x32xf32>
      tpu.vector_store %arg16[%c0_35, %c0_36], %65 {strides = array<i32>} : memref<8x32xf32, #tpu.memory_space<vmem>>, vector<8x32xf32>,
    } else {
    }
    %3 = arith.index_cast %arg2 : i32 to index
    %c0 = arith.constant 0 : index
    %c0_1 = arith.constant 0 : index
    %4 = vector.load %arg10[%3, %c0, %c0_1] : memref<4x3x8xf32, #tpu.memory_space<vmem>>, vector<1x3x8xf32>
    %5 = vector.shape_cast %4 : vector<1x3x8xf32> to vector<3x8xf32>
    %c0_i32_2 = arith.constant 0 : i32
    %6 = arith.cmpi eq, %arg1, %c0_i32_2 : i32
    %7 = arith.extui %6 : i1 to i32
    %c0_i32_3 = arith.constant 0 : i32
    %8 = arith.cmpi ne, %7, %c0_i32_3 : i32
    scf.if %8 {
      %c0_24 = arith.constant 0 : index
      %c0_25 = arith.constant 0 : index
      %c0_26 = arith.constant 0 : index
      %48 = vector.load %arg4[%c0_24, %c0_25, %c0_26] : memref<1x16x32xbf16, #tpu.memory_space<vmem>>, vector<1x16x32xbf16>
      %49 = vector.shape_cast %48 : vector<1x16x32xbf16> to vector<16x32xbf16>
      %50 = arith.index_cast %arg2 : i32 to index
      %c0_27 = arith.constant 0 : index
      %c0_28 = arith.constant 0 : index
      %51 = vector.load %arg7[%50, %c0_27, %c0_28] : memref<4x32x8xbf16, #tpu.memory_space<vmem>>, vector<1x32x8xbf16>
      %52 = vector.shape_cast %51 : vector<1x32x8xbf16> to vector<32x8xbf16>
      %cst_29 = arith.constant dense<0.000000e+00> : vector<16x8xf32>
      %53 = tpu.matmul %49, %52, %cst_29 {dimension_numbers = #tpu.dot_dimension_numbers<[1], [0], [0], [1], [0, 0, 1, 1], [], []>} : vector<16x32xbf16>, vector<32x8xbf16>, vector<16x8xf32> -> vector<16x8xf32>
      %54 = vector.extract_strided_slice %5 {offsets = [1, 0], sizes = [1, 8], strides = [1, 1]} : vector<3x8xf32> to vector<1x8xf32>
      %55 = vector.broadcast %54 : vector<1x8xf32> to vector<16x8xf32>
      %56 = arith.addf %53, %55 : vector<16x8xf32>
      %57 = arith.index_cast %arg2 : i32 to index
      %c0_30 = arith.constant 0 : index
      %c0_31 = arith.constant 0 : index
      %58 = vector.load %arg8[%57, %c0_30, %c0_31] : memref<4x32x8xbf16, #tpu.memory_space<vmem>>, vector<1x32x8xbf16>
      %59 = vector.shape_cast %58 : vector<1x32x8xbf16> to vector<32x8xbf16>
      %cst_32 = arith.constant dense<0.000000e+00> : vector<16x8xf32>
      %60 = tpu.matmul %49, %59, %cst_32 {dimension_numbers = #tpu.dot_dimension_numbers<[1], [0], [0], [1], [0, 0, 1, 1], [], []>} : vector<16x32xbf16>, vector<32x8xbf16>, vector<16x8xf32> -> vector<16x8xf32>
      %61 = vector.extract_strided_slice %5 {offsets = [2, 0], sizes = [1, 8], strides = [1, 1]} : vector<3x8xf32> to vector<1x8xf32>
      %62 = vector.broadcast %61 : vector<1x8xf32> to vector<16x8xf32>
      %63 = arith.addf %60, %62 : vector<16x8xf32>
      %64 = arith.truncf %56 : vector<16x8xf32> to vector<16x8xbf16>
      %65 = arith.index_cast %arg2 : i32 to index
      %c0_33 = arith.constant 0 : index
      %c0_34 = arith.constant 0 : index
      %66 = vector.load %arg14[%65, %c0_33, %c0_34] : memref<4x16x8xbf16, #tpu.memory_space<vmem>>, vector<1x16x8xbf16>
      %67 = vector.shape_cast %66 : vector<1x16x8xbf16> to vector<16x8xbf16>
      %68 = vector.shape_cast %64 : vector<16x8xbf16> to vector<1x16x8xbf16>
      tpu.vector_store %arg14[%65, %c0_33, %c0_34], %68 {strides = array<i32>} : memref<4x16x8xbf16, #tpu.memory_space<vmem>>, vector<1x16x8xbf16>,
      %69 = arith.truncf %63 : vector<16x8xf32> to vector<16x8xbf16>
      %70 = arith.index_cast %arg2 : i32 to index
      %c0_35 = arith.constant 0 : index
      %c0_36 = arith.constant 0 : index
      %71 = vector.load %arg15[%70, %c0_35, %c0_36] : memref<4x16x8xbf16, #tpu.memory_space<vmem>>, vector<1x16x8xbf16>
      %72 = vector.shape_cast %71 : vector<1x16x8xbf16> to vector<16x8xbf16>
      %73 = vector.shape_cast %69 : vector<16x8xbf16> to vector<1x16x8xbf16>
      tpu.vector_store %arg15[%70, %c0_35, %c0_36], %73 {strides = array<i32>} : memref<4x16x8xbf16, #tpu.memory_space<vmem>>, vector<1x16x8xbf16>,
    } else {
    }
    %c0_4 = arith.constant 0 : index
    %c0_5 = arith.constant 0 : index
    %9 = vector.load %arg13[%c0_4, %c0_5] : memref<8x32xbf16, #tpu.memory_space<vmem>>, vector<8x32xbf16>
    %10 = arith.index_cast %arg2 : i32 to index
    %c0_6 = arith.constant 0 : index
    %c0_7 = arith.constant 0 : index
    %11 = vector.load %arg6[%10, %c0_6, %c0_7] : memref<4x32x8xbf16, #tpu.memory_space<vmem>>, vector<1x32x8xbf16>
    %12 = vector.shape_cast %11 : vector<1x32x8xbf16> to vector<32x8xbf16>
    %cst = arith.constant dense<0.000000e+00> : vector<8x8xf32>
    %13 = tpu.matmul %9, %12, %cst {dimension_numbers = #tpu.dot_dimension_numbers<[1], [0], [0], [1], [0, 0, 1, 1], [], []>} : vector<8x32xbf16>, vector<32x8xbf16>, vector<8x8xf32> -> vector<8x8xf32>
    %14 = vector.extract_strided_slice %5 {offsets = [0, 0], sizes = [1, 8], strides = [1, 1]} : vector<3x8xf32> to vector<1x8xf32>
    %15 = vector.broadcast %14 : vector<1x8xf32> to vector<8x8xf32>
    %16 = arith.addf %13, %15 : vector<8x8xf32>
    %17 = arith.truncf %16 : vector<8x8xf32> to vector<8x8xbf16>
    %18 = arith.index_cast %arg2 : i32 to index
    %c0_8 = arith.constant 0 : index
    %c0_9 = arith.constant 0 : index
    %19 = vector.load %arg14[%18, %c0_8, %c0_9] : memref<4x16x8xbf16, #tpu.memory_space<vmem>>, vector<1x16x8xbf16>
    %20 = vector.shape_cast %19 : vector<1x16x8xbf16> to vector<16x8xbf16>
    %21 = arith.index_cast %arg2 : i32 to index
    %c0_10 = arith.constant 0 : index
    %c0_11 = arith.constant 0 : index
    %22 = vector.load %arg15[%21, %c0_10, %c0_11] : memref<4x16x8xbf16, #tpu.memory_space<vmem>>, vector<1x16x8xbf16>
    %23 = vector.shape_cast %22 : vector<1x16x8xbf16> to vector<16x8xbf16>
    %cst_12 = arith.constant dense<0.000000e+00> : vector<8x16xf32>
    %24 = tpu.matmul %17, %20, %cst_12 {dimension_numbers = #tpu.dot_dimension_numbers<[1], [1], [0], [0], [0, 0, 1, 0], [], []>} : vector<8x8xbf16>, vector<16x8xbf16>, vector<8x16xf32> -> vector<8x16xf32>
    %cst_13 = arith.constant dense<0xFF800000> : vector<8xf32>
    %25 = vector.multi_reduction <maximumf>, %24, %cst_13 [1] : vector<8x16xf32> to vector<8xf32>
    %26 = vector.shape_cast %25 : vector<8xf32> to vector<8x1xf32>
    %27 = vector.broadcast %26 : vector<8x1xf32> to vector<8x16xf32>
    %28 = arith.subf %24, %27 : vector<8x16xf32>
    %29 = math.exp %28 : vector<8x16xf32>
    %cst_14 = arith.constant dense<0.000000e+00> : vector<8xf32>
    %30 = vector.multi_reduction <add>, %29, %cst_14 [1] : vector<8x16xf32> to vector<8xf32>
    %31 = vector.shape_cast %30 : vector<8xf32> to vector<8x1xf32>
    %32 = arith.truncf %29 : vector<8x16xf32> to vector<8x16xbf16>
    %cst_15 = arith.constant dense<0.000000e+00> : vector<8x8xf32>
    %33 = tpu.matmul %32, %23, %cst_15 {dimension_numbers = #tpu.dot_dimension_numbers<[1], [0], [0], [1], [0, 0, 1, 1], [], []>} : vector<8x16xbf16>, vector<16x8xbf16>, vector<8x8xf32> -> vector<8x8xf32>
    %34 = tpu.reciprocal %31 {approx = true} : vector<8x1xf32> -> vector<8x1xf32>
    %35 = vector.broadcast %34 : vector<8x1xf32> to vector<8x8xf32>
    %36 = arith.mulf %33, %35 : vector<8x8xf32>
    %c0_16 = arith.constant 0 : index
    %c0_17 = arith.constant 0 : index
    %37 = vector.load %arg16[%c0_16, %c0_17] : memref<8x32xf32, #tpu.memory_space<vmem>>, vector<8x32xf32>
    %38 = arith.truncf %36 : vector<8x8xf32> to vector<8x8xbf16>
    %39 = arith.index_cast %arg2 : i32 to index
    %c0_18 = arith.constant 0 : index
    %c0_19 = arith.constant 0 : index
    %40 = vector.load %arg9[%39, %c0_18, %c0_19] : memref<4x8x32xbf16, #tpu.memory_space<vmem>>, vector<1x8x32xbf16>
    %41 = vector.shape_cast %40 : vector<1x8x32xbf16> to vector<8x32xbf16>
    %cst_20 = arith.constant dense<0.000000e+00> : vector<8x32xf32>
    %42 = tpu.matmul %38, %41, %cst_20 {dimension_numbers = #tpu.dot_dimension_numbers<[1], [0], [0], [1], [0, 0, 1, 1], [], []>} : vector<8x8xbf16>, vector<8x32xbf16>, vector<8x32xf32> -> vector<8x32xf32>
    %43 = arith.addf %37, %42 : vector<8x32xf32>
    %c0_21 = arith.constant 0 : index
    %c0_22 = arith.constant 0 : index
    %44 = vector.load %arg16[%c0_21, %c0_22] : memref<8x32xf32, #tpu.memory_space<vmem>>, vector<8x32xf32>
    tpu.vector_store %arg16[%c0_21, %c0_22], %43 {strides = array<i32>} : memref<8x32xf32, #tpu.memory_space<vmem>>, vector<8x32xf32>,
    %c3_i32 = arith.constant 3 : i32
    %45 = arith.cmpi eq, %arg2, %c3_i32 : i32
    %46 = arith.extui %45 : i1 to i32
    %c0_i32_23 = arith.constant 0 : i32
    %47 = arith.cmpi ne, %46, %c0_i32_23 : i32
    scf.if %47 {
      %c0_24 = arith.constant 0 : index
      %c0_25 = arith.constant 0 : index
      %48 = vector.load %arg16[%c0_24, %c0_25] : memref<8x32xf32, #tpu.memory_space<vmem>>, vector<8x32xf32>
      %c0_26 = arith.constant 0 : index
      %c0_27 = arith.constant 0 : index
      %49 = vector.load %arg11[%c0_26, %c0_27] : memref<1x32xf32, #tpu.memory_space<vmem>>, vector<1x32xf32>
      %50 = vector.broadcast %49 : vector<1x32xf32> to vector<8x32xf32>
      %51 = arith.addf %48, %50 : vector<8x32xf32>
      %52 = vector.shape_cast %51 : vector<8x32xf32> to vector<1x8x32xf32>
      %c0_28 = arith.constant 0 : index
      %c0_29 = arith.constant 0 : index
      %c0_30 = arith.constant 0 : index
      %53 = vector.load %arg12[%c0_28, %c0_29, %c0_30] : memref<1x8x32xf32, #tpu.memory_space<vmem>>, vector<1x8x32xf32>
      tpu.vector_store %arg12[%c0_28, %c0_29, %c0_30], %52 {strides = array<i32>} : memref<1x8x32xf32, #tpu.memory_space<vmem>>, vector<1x8x32xf32>,
    } else {
    }
    return
  }
  func.func @transform_0(%arg0: i32, %arg1: i32, %arg2: i32) -> (i32, i32, i32) {
    %c0_i32 = arith.constant 0 : i32
    %c0_i32_0 = arith.constant 0 : i32
    return %arg0, %arg1, %c0_i32 : i32, i32, i32
  }
  func.func @transform_1(%arg0: i32, %arg1: i32, %arg2: i32) -> (i32, i32, i32) {
    %c0_i32 = arith.constant 0 : i32
    %c0_i32_0 = arith.constant 0 : i32
    %c0_i32_1 = arith.constant 0 : i32
    return %arg0, %c0_i32, %c0_i32_0 : i32, i32, i32
  }
  func.func @transform_2(%arg0: i32, %arg1: i32, %arg2: i32) -> (i32, i32) {
    %c0_i32 = arith.constant 0 : i32
    %c0_i32_0 = arith.constant 0 : i32
    %c0_i32_1 = arith.constant 0 : i32
    return %c0_i32, %c0_i32_0 : i32, i32
  }
  func.func @transform_3(%arg0: i32, %arg1: i32, %arg2: i32) -> (i32, i32, i32) {
    %c0_i32 = arith.constant 0 : i32
    %c0_i32_0 = arith.constant 0 : i32
    %c0_i32_1 = arith.constant 0 : i32
    %c0_i32_2 = arith.constant 0 : i32
    return %c0_i32, %c0_i32_0, %c0_i32_1 : i32, i32, i32
  }
  func.func @transform_4(%arg0: i32, %arg1: i32, %arg2: i32) -> (i32, i32, i32) {
    %c0_i32 = arith.constant 0 : i32
    %c0_i32_0 = arith.constant 0 : i32
    %c0_i32_1 = arith.constant 0 : i32
    %c0_i32_2 = arith.constant 0 : i32
    return %c0_i32, %c0_i32_0, %c0_i32_1 : i32, i32, i32
  }
  func.func @transform_5(%arg0: i32, %arg1: i32, %arg2: i32) -> (i32, i32, i32) {
    %c0_i32 = arith.constant 0 : i32
    %c0_i32_0 = arith.constant 0 : i32
    %c0_i32_1 = arith.constant 0 : i32
    %c0_i32_2 = arith.constant 0 : i32
    return %c0_i32, %c0_i32_0, %c0_i32_1 : i32, i32, i32
  }
  func.func @transform_6(%arg0: i32, %arg1: i32, %arg2: i32) -> (i32, i32, i32) {
    %c0_i32 = arith.constant 0 : i32
    %c0_i32_0 = arith.constant 0 : i32
    %c0_i32_1 = arith.constant 0 : i32
    %c0_i32_2 = arith.constant 0 : i32
    return %c0_i32, %c0_i32_0, %c0_i32_1 : i32, i32, i32
  }
  func.func @transform_7(%arg0: i32, %arg1: i32, %arg2: i32) -> (i32, i32, i32) {
    %c0_i32 = arith.constant 0 : i32
    %c0_i32_0 = arith.constant 0 : i32
    %c0_i32_1 = arith.constant 0 : i32
    %c0_i32_2 = arith.constant 0 : i32
    return %c0_i32, %c0_i32_0, %c0_i32_1 : i32, i32, i32
  }
  func.func @transform_8(%arg0: i32, %arg1: i32, %arg2: i32) -> (i32, i32) {
    %c0_i32 = arith.constant 0 : i32
    %c0_i32_0 = arith.constant 0 : i32
    %c0_i32_1 = arith.constant 0 : i32
    return %c0_i32, %c0_i32_0 : i32, i32
  }
  func.func @transform_9(%arg0: i32, %arg1: i32, %arg2: i32) -> (i32, i32, i32) {
    %c0_i32 = arith.constant 0 : i32
    %c0_i32_0 = arith.constant 0 : i32
    return %arg0, %arg1, %c0_i32 : i32, i32, i32
  }
}

</mosaic_0001>

<llo_original>
// kernel: tpu_custom_call.1
$region0: #{tpu_custom_call.1}
  #allocation0 [shape = 'u32[]', space=smem, size = 0x4, offset = 0x4, fixed_abs, tag = 'smem constant byte address 0x4 - core index']
  #allocation1 [shape = 'u32[144,128]{1,0:T(1,128)}', space=vmem, size = 0x12000, scoped, tag = 'internal scratch']
  #allocation2 [shape = 'bf16[8,32]{1,0:T(8,128)(2,1)}', space=vmem, size = 0x800, scoped, tag = 'scratch operand']
  #allocation3 [shape = 'bf16[4,16,8]{2,1,0:T(16,128)(2,1)}', space=vmem, size = 0x4000, scoped, tag = 'scratch operand']
  #allocation4 [shape = 'bf16[4,16,8]{2,1,0:T(16,128)(2,1)}', space=vmem, size = 0x4000, scoped, tag = 'scratch operand']
  #allocation5 [shape = 'f32[8,32]{1,0:T(8,128)}', space=vmem, size = 0x1000, scoped, tag = 'scratch operand']
  %s0 = inlined_call_operand.vmem [shape: f32[2,8,32], index: 0, kind: input, shape index: {}]
  %s1 = inlined_call_operand.vmem [shape: bf16[2,16,32], index: 1, kind: input, shape index: {}]
  %s2 = inlined_call_operand.vmem [shape: f32[1,32], index: 2, kind: input, shape index: {}]
  %s3 = inlined_call_operand.vmem [shape: bf16[4,32,8], index: 3, kind: input, shape index: {}]
  %s4 = inlined_call_operand.vmem [shape: bf16[4,32,8], index: 4, kind: input, shape index: {}]
  %s5 = inlined_call_operand.vmem [shape: bf16[4,32,8], index: 5, kind: input, shape index: {}]
  %s6 = inlined_call_operand.vmem [shape: bf16[4,8,32], index: 6, kind: input, shape index: {}]
  %s7 = inlined_call_operand.vmem [shape: f32[4,3,8], index: 7, kind: input, shape index: {}]
  %s8 = inlined_call_operand.vmem [shape: f32[1,32], index: 8, kind: input, shape index: {}]
  %s9 = inlined_call_operand.hbm [shape: f32[2,8,32], index: 9, kind: output, shape index: {}]
  %s10 = sld [smem:[#allocation0]]
  $region81: #{tpu_custom_call.1} parent=0
    _
  %s12 = ssub.s32 1, %s10
  %s13 = scalar_select 0, %s12, %s10
  $region1: #{tpu_custom_call.1} parent=0
    #allocation6 [shape = 'u8[8192]{0}', space=vmem, size = 0x2000, scoped, tag = 'output window, operand 0']
    #allocation7 [shape = 's32[2]{0}', space=sflag, size = 0x8, scoped, tag = 'scoped memory for tpu_custom_call.1']
    %14 = vsyncpa [#allocation7], 0
    %s15 = scalar_lea.sflag [#allocation7], 1
    %16 = vsyncpa %s15, 0
    loop: start=0, step=1, limit=10
    $region2: #{tpu_custom_call.1} parent=1 // loop_pre_header
      _
    $region3: #{tpu_custom_call.1} parent=1 // loop_header
      %s18 = sphi 0, %s22
      %p19 = scmp.ge.s32.totalorder %s18, 10
      %s25 = sphi 0, %s44
      %s26 = sphi 0, %s40
      %s27 = sphi 0, %s36
      %s28 = sphi 0, %s25
      %s29 = sphi 0, %s26
      %s30 = sphi 0, %s27
      %s31 = sphi 0, %s28
      %s32 = sphi 0, %s29
      %s33 = sphi 0, %s30
      %s49 = sphi 0, %s51
      %s52 = sphi 0, %s49
      %s53 = sphi 0, %s52
      %s69 = sphi 0, %s53
      %s75 = sphi 0, %s77
      %s78 = sphi 0, %s75
      %s79 = sphi 0, %s78
      %s95 = sphi 0, %s79
      %s99 = sphi 0, %s99
      %s101 = sphi 0, %s99
      %s102 = sphi 0, %s101
      %s116 = sphi 0, %s102
      %s120 = sphi 0, %s120
      %s122 = sphi 0, %s120
      %s123 = sphi 0, %s122
      %s137 = sphi 0, %s123
      %s141 = sphi 0, %s141
      %s143 = sphi 0, %s141
      %s144 = sphi 0, %s143
      %s158 = sphi 0, %s144
      %s162 = sphi 0, %s162
      %s164 = sphi 0, %s162
      %s165 = sphi 0, %s164
      %s179 = sphi 0, %s165
      %s183 = sphi 0, %s183
      %s185 = sphi 0, %s183
      %s186 = sphi 0, %s185
      %s200 = sphi 0, %s186
      %s204 = sphi 0, %s204
      %s206 = sphi 0, %s204
      %s207 = sphi 0, %s206
      %s221 = sphi 0, %s207
      %s225 = sphi 0, %s225
      %s227 = sphi 0, %s225
      %s228 = sphi 0, %s227
      %s242 = sphi 0, %s228
      %s250 = sphi 0, %s252
      %s253 = sphi 0, %s250
      %s254 = sphi 0, %s253
      %s270 = sphi 0, %s254
    $region4: #{tpu_custom_call.1} parent=1 // loop_header_branch
      %21 = sbr.rel (%p19) target = $region8
    $region5: #{tpu_custom_call.1} parent=1 // loop_body
      %s23 = ssub.s32 %s18, 1
      %s24 = ssub.s32 %s18, 2
      %s34 = sadd.s32 1, %s27
      %p35 = scmp.ge.s32.totalorder %s34, 4
      %s36 = scalar_select %p35, 0, %s34
      %s37 = sadd.s32 1, %s26
      %s38 = scalar_select %p35, %s37, %s26
      %p39 = scmp.ge.s32.totalorder %s38, 1
      %s40 = scalar_select %p39, 0, %s38
      %s41 = sadd.s32 1, %s25
      %s42 = scalar_select %p39, %s41, %s25
      %p43 = scmp.ge.s32.totalorder %s42, 2
      %s44 = scalar_select %p43, 0, %s42
      %s45 = ssub.s32 %s25, %s44
      %s46 = ssub.s32 %s26, %s40
      %s47 = sor.u32 %s45, %s46
      %p48 = scmp.eq.s32.totalorder %s47, 0
      %s50 = sadd.s32 %s49, 1
      %s51 = scalar_select %p48, %s49, %s50
      %p54 = pneg %p48
      %p55 = scmp.eq.s32.totalorder %s18, 7
      %p56 = por %p54, %p55
      %p57 = scmp.ne.s32.totalorder %s49, %s52
      %p58 = scmp.eq.s32.totalorder %s18, 0
      %p59 = por %p57, %p58
      %p60 = scmp.ne.s32.totalorder %s49, %s52
      %p61 = scmp.eq.s32.totalorder %s23, 7
      %p62 = por %p60, %p61
      %p63 = scmp.ne.s32.totalorder %s52, %s53
      %p64 = scmp.eq.s32.totalorder %s23, 0
      %p65 = por %p63, %p64
      %p66 = scmp.ne.s32.totalorder %s52, %s53
      %p67 = scmp.eq.s32.totalorder %s24, 7
      %p68 = por %p66, %p67
      %p70 = scmp.ne.s32.totalorder %s53, %s69
      %p71 = scmp.eq.s32.totalorder %s24, 0
      %p72 = por %p70, %p71
      %s73 = ssub.s32 %s25, %s44
      %p74 = scmp.eq.s32.totalorder %s73, 0
      %s76 = sadd.s32 %s75, 1
      %s77 = scalar_select %p74, %s75, %s76
      %p80 = pneg %p74
      %p81 = scmp.eq.s32.totalorder %s18, 7
      %p82 = por %p80, %p81
      %p83 = scmp.ne.s32.totalorder %s75, %s78
      %p84 = scmp.eq.s32.totalorder %s18, 0
      %p85 = por %p83, %p84
      %p86 = scmp.ne.s32.totalorder %s75, %s78
      %p87 = scmp.eq.s32.totalorder %s23, 7
      %p88 = por %p86, %p87
      %p89 = scmp.ne.s32.totalorder %s78, %s79
      %p90 = scmp.eq.s32.totalorder %s23, 0
      %p91 = por %p89, %p90
      %p92 = scmp.ne.s32.totalorder %s78, %s79
      %p93 = scmp.eq.s32.totalorder %s24, 7
      %p94 = por %p92, %p93
      %p96 = scmp.ne.s32.totalorder %s79, %s95
      %p97 = scmp.eq.s32.totalorder %s24, 0
      %p98 = por %p96, %p97
      %s100 = sadd.s32 %s99, 1
      %p103 = scmp.eq.s32.totalorder %s18, 7
      %p104 = scmp.ne.s32.totalorder %s99, %s101
      %p105 = scmp.eq.s32.totalorder %s18, 0
      %p106 = por %p104, %p105
      %p107 = scmp.ne.s32.totalorder %s99, %s101
      %p108 = scmp.eq.s32.totalorder %s23, 7
      %p109 = por %p107, %p108
      %p110 = scmp.ne.s32.totalorder %s101, %s102
      %p111 = scmp.eq.s32.totalorder %s23, 0
      %p112 = por %p110, %p111
      %p113 = scmp.ne.s32.totalorder %s101, %s102
      %p114 = scmp.eq.s32.totalorder %s24, 7
      %p115 = por %p113, %p114
      %p117 = scmp.ne.s32.totalorder %s102, %s116
      %p118 = scmp.eq.s32.totalorder %s24, 0
      %p119 = por %p117, %p118
      %s121 = sadd.s32 %s120, 1
      %p124 = scmp.eq.s32.totalorder %s18, 7
      %p125 = scmp.ne.s32.totalorder %s120, %s122
      %p126 = scmp.eq.s32.totalorder %s18, 0
      %p127 = por %p125, %p126
      %p128 = scmp.ne.s32.totalorder %s120, %s122
      %p129 = scmp.eq.s32.totalorder %s23, 7
      %p130 = por %p128, %p129
      %p131 = scmp.ne.s32.totalorder %s122, %s123
      %p132 = scmp.eq.s32.totalorder %s23, 0
      %p133 = por %p131, %p132
      %p134 = scmp.ne.s32.totalorder %s122, %s123
      %p135 = scmp.eq.s32.totalorder %s24, 7
      %p136 = por %p134, %p135
      %p138 = scmp.ne.s32.totalorder %s123, %s137
      %p139 = scmp.eq.s32.totalorder %s24, 0
      %p140 = por %p138, %p139
      %s142 = sadd.s32 %s141, 1
      %p145 = scmp.eq.s32.totalorder %s18, 7
      %p146 = scmp.ne.s32.totalorder %s141, %s143
      %p147 = scmp.eq.s32.totalorder %s18, 0
      %p148 = por %p146, %p147
      %p149 = scmp.ne.s32.totalorder %s141, %s143
      %p150 = scmp.eq.s32.totalorder %s23, 7
      %p151 = por %p149, %p150
      %p152 = scmp.ne.s32.totalorder %s143, %s144
      %p153 = scmp.eq.s32.totalorder %s23, 0
      %p154 = por %p152, %p153
      %p155 = scmp.ne.s32.totalorder %s143, %s144
      %p156 = scmp.eq.s32.totalorder %s24, 7
      %p157 = por %p155, %p156
      %p159 = scmp.ne.s32.totalorder %s144, %s158
      %p160 = scmp.eq.s32.totalorder %s24, 0
      %p161 = por %p159, %p160
      %s163 = sadd.s32 %s162, 1
      %p166 = scmp.eq.s32.totalorder %s18, 7
      %p167 = scmp.ne.s32.totalorder %s162, %s164
      %p168 = scmp.eq.s32.totalorder %s18, 0
      %p169 = por %p167, %p168
      %p170 = scmp.ne.s32.totalorder %s162, %s164
      %p171 = scmp.eq.s32.totalorder %s23, 7
      %p172 = por %p170, %p171
      %p173 = scmp.ne.s32.totalorder %s164, %s165
      %p174 = scmp.eq.s32.totalorder %s23, 0
      %p175 = por %p173, %p174
      %p176 = scmp.ne.s32.totalorder %s164, %s165
      %p177 = scmp.eq.s32.totalorder %s24, 7
      %p178 = por %p176, %p177
      %p180 = scmp.ne.s32.totalorder %s165, %s179
      %p181 = scmp.eq.s32.totalorder %s24, 0
      %p182 = por %p180, %p181
      %s184 = sadd.s32 %s183, 1
      %p187 = scmp.eq.s32.totalorder %s18, 7
      %p188 = scmp.ne.s32.totalorder %s183, %s185
      %p189 = scmp.eq.s32.totalorder %s18, 0
      %p190 = por %p188, %p189
      %p191 = scmp.ne.s32.totalorder %s183, %s185
      %p192 = scmp.eq.s32.totalorder %s23, 7
      %p193 = por %p191, %p192
      %p194 = scmp.ne.s32.totalorder %s185, %s186
      %p195 = scmp.eq.s32.totalorder %s23, 0
      %p196 = por %p194, %p195
      %p197 = scmp.ne.s32.totalorder %s185, %s186
      %p198 = scmp.eq.s32.totalorder %s24, 7
      %p199 = por %p197, %p198
      %p201 = scmp.ne.s32.totalorder %s186, %s200
      %p202 = scmp.eq.s32.totalorder %s24, 0
      %p203 = por %p201, %p202
      %s205 = sadd.s32 %s204, 1
      %p208 = scmp.eq.s32.totalorder %s18, 7
      %p209 = scmp.ne.s32.totalorder %s204, %s206
      %p210 = scmp.eq.s32.totalorder %s18, 0
      %p211 = por %p209, %p210
      %p212 = scmp.ne.s32.totalorder %s204, %s206
      %p213 = scmp.eq.s32.totalorder %s23, 7
      %p214 = por %p212, %p213
      %p215 = scmp.ne.s32.totalorder %s206, %s207
      %p216 = scmp.eq.s32.totalorder %s23, 0
      %p217 = por %p215, %p216
      %p218 = scmp.ne.s32.totalorder %s206, %s207
      %p219 = scmp.eq.s32.totalorder %s24, 7
      %p220 = por %p218, %p219
      %p222 = scmp.ne.s32.totalorder %s207, %s221
      %p223 = scmp.eq.s32.totalorder %s24, 0
      %p224 = por %p222, %p223
      %s226 = sadd.s32 %s225, 1
      %p229 = scmp.eq.s32.totalorder %s18, 7
      %p230 = scmp.ne.s32.totalorder %s225, %s227
      %p231 = scmp.eq.s32.totalorder %s18, 0
      %p232 = por %p230, %p231
      %p233 = scmp.ne.s32.totalorder %s225, %s227
      %p234 = scmp.eq.s32.totalorder %s23, 7
      %p235 = por %p233, %p234
      %p236 = scmp.ne.s32.totalorder %s227, %s228
      %p237 = scmp.eq.s32.totalorder %s23, 0
      %p238 = por %p236, %p237
      %p239 = scmp.ne.s32.totalorder %s227, %s228
      %p240 = scmp.eq.s32.totalorder %s24, 7
      %p241 = por %p239, %p240
      %p243 = scmp.ne.s32.totalorder %s228, %s242
      %p244 = scmp.eq.s32.totalorder %s24, 0
      %p245 = por %p243, %p244
      %s246 = ssub.s32 %s25, %s44
      %s247 = ssub.s32 %s26, %s40
      %s248 = sor.u32 %s246, %s247
      %p249 = scmp.eq.s32.totalorder %s248, 0
      %s251 = sadd.s32 %s250, 1
      %s252 = scalar_select %p249, %s250, %s251
      %p255 = pneg %p249
      %p256 = scmp.eq.s32.totalorder %s18, 7
      %p257 = por %p255, %p256
      %p258 = scmp.ne.s32.totalorder %s250, %s253
      %p259 = scmp.eq.s32.totalorder %s18, 0
      %p260 = por %p258, %p259
      %p261 = scmp.ne.s32.totalorder %s250, %s253
      %p262 = scmp.eq.s32.totalorder %s23, 7
      %p263 = por %p261, %p262
      %p264 = scmp.ne.s32.totalorder %s253, %s254
      %p265 = scmp.eq.s32.totalorder %s23, 0
      %p266 = por %p264, %p265
      %p267 = scmp.ne.s32.totalorder %s253, %s254
      %p268 = scmp.eq.s32.totalorder %s24, 7
      %p269 = por %p267, %p268
      %p271 = scmp.ne.s32.totalorder %s254, %s270
      %p272 = scmp.eq.s32.totalorder %s24, 0
      %p273 = por %p271, %p272
      %p274 = scmp.le.s32.totalorder 1, %s18
      %p275 = scmp.lt.s32.totalorder %s18, 9
      %p276 = pnand %p274, %p275
      %p277 = pneg %p276
      // Predicated region
      $region9: #{tpu_custom_call.1} parent=5 // pred_check
        _
      $region10: #{tpu_custom_call.1} parent=5 // pred_check_branch
        %279 = sbr.rel (%p276) target = $region12
      $region11: #{tpu_custom_call.1} parent=5 // pred_region
        %s280 = ssub.s32 %s18, 1
        // Predicated region
        $region13: #{tpu_custom_call.1} parent=11 // pred_check
          %p281 = pneg %p112
        $region14: #{tpu_custom_call.1} parent=11 // pred_check_branch
          %283 = sbr.rel (%p281) target = $region16
        $region15: #{tpu_custom_call.1} parent=11 // pred_region
          _
        $region16: #{tpu_custom_call.1} parent=11 // pred_fallthru
          _
        // Predicated region
        $region17: #{tpu_custom_call.1} parent=11 // pred_check
          %p284 = pneg %p133
        $region18: #{tpu_custom_call.1} parent=11 // pred_check_branch
          %286 = sbr.rel (%p284) target = $region20
        $region19: #{tpu_custom_call.1} parent=11 // pred_region
          _
        $region20: #{tpu_custom_call.1} parent=11 // pred_fallthru
          _
        // Predicated region
        $region21: #{tpu_custom_call.1} parent=11 // pred_check
          %p287 = pneg %p154
        $region22: #{tpu_custom_call.1} parent=11 // pred_check_branch
          %289 = sbr.rel (%p287) target = $region24
        $region23: #{tpu_custom_call.1} parent=11 // pred_region
          _
        $region24: #{tpu_custom_call.1} parent=11 // pred_fallthru
          _
        // Predicated region
        $region25: #{tpu_custom_call.1} parent=11 // pred_check
          %p290 = pneg %p175
        $region26: #{tpu_custom_call.1} parent=11 // pred_check_branch
          %292 = sbr.rel (%p290) target = $region28
        $region27: #{tpu_custom_call.1} parent=11 // pred_region
          _
        $region28: #{tpu_custom_call.1} parent=11 // pred_fallthru
          _
        // Predicated region
        $region29: #{tpu_custom_call.1} parent=11 // pred_check
          %p293 = pneg %p196
        $region30: #{tpu_custom_call.1} parent=11 // pred_check_branch
          %295 = sbr.rel (%p293) target = $region32
        $region31: #{tpu_custom_call.1} parent=11 // pred_region
          _
        $region32: #{tpu_custom_call.1} parent=11 // pred_fallthru
          _
        // Predicated region
        $region33: #{tpu_custom_call.1} parent=11 // pred_check
          %p296 = pneg %p217
        $region34: #{tpu_custom_call.1} parent=11 // pred_check_branch
          %298 = sbr.rel (%p296) target = $region36
        $region35: #{tpu_custom_call.1} parent=11 // pred_region
          _
        $region36: #{tpu_custom_call.1} parent=11 // pred_fallthru
          _
        // Predicated region
        $region37: #{tpu_custom_call.1} parent=11 // pred_check
          %p299 = pneg %p238
        $region38: #{tpu_custom_call.1} parent=11 // pred_check_branch
          %301 = sbr.rel (%p299) target = $region40
        $region39: #{tpu_custom_call.1} parent=11 // pred_region
          _
        $region40: #{tpu_custom_call.1} parent=11 // pred_fallthru
          _
      $region12: #{tpu_custom_call.1} parent=5 // pred_fallthru
        _
      %p302 = scmp.lt.s32.totalorder %s18, 8
      // Predicated region
      $region41: #{tpu_custom_call.1} parent=5 // pred_check
        %p303 = pneg %p302
      $region42: #{tpu_custom_call.1} parent=5 // pred_check_branch
        %305 = sbr.rel (%p303) target = $region44
      $region43: #{tpu_custom_call.1} parent=5 // pred_region
        // Predicated region
        $region45: #{tpu_custom_call.1} parent=43 // pred_check
          %p306 = pneg %p59
        $region46: #{tpu_custom_call.1} parent=43 // pred_check_branch
          %308 = sbr.rel (%p306) target = $region48
        $region47: #{tpu_custom_call.1} parent=43 // pred_region
          %p309 = scmp.lt.s32.totalorder %s25, 1
          %s310 = scalar_select %p309, %s25, 1
          %p311 = scmp.lt.s32.totalorder %s26, 0
          %s312 = scalar_select %p311, %s26, 0
          %s313 = sadd.s32 %s312, %s310
          %s314 = smul.addr %s313, 8
          %s315 = scalar_lea.vmem %s0, %s314
        $region48: #{tpu_custom_call.1} parent=43 // pred_fallthru
          _
        // Predicated region
        $region49: #{tpu_custom_call.1} parent=43 // pred_check
          %p316 = pneg %p85
        $region50: #{tpu_custom_call.1} parent=43 // pred_check_branch
          %318 = sbr.rel (%p316) target = $region52
        $region51: #{tpu_custom_call.1} parent=43 // pred_region
          %p319 = scmp.lt.s32.totalorder %s25, 1
          %s320 = scalar_select %p319, %s25, 1
          %s321 = smul.addr %s320, 2
          %s322 = smul.addr %s321, 4
          %s323 = scalar_lea.vmem %s1, %s322
        $region52: #{tpu_custom_call.1} parent=43 // pred_fallthru
          _
      $region44: #{tpu_custom_call.1} parent=5 // pred_fallthru
        _
      %p324 = scmp.le.s32.totalorder 1, %s18
      %p325 = scmp.lt.s32.totalorder %s18, 9
      %p326 = pnand %p324, %p325
      %p327 = pneg %p326
      // Predicated region
      $region53: #{tpu_custom_call.1} parent=5 // pred_check
        _
      $region54: #{tpu_custom_call.1} parent=5 // pred_check_branch
        %329 = sbr.rel (%p326) target = $region56
      $region55: #{tpu_custom_call.1} parent=5 // pred_region
        %s330 = ssub.s32 %s18, 1
        %p331 = scmp.lt.s32.totalorder %s28, 1
        %s332 = scalar_select %p331, %s28, 1
        %p333 = scmp.lt.s32.totalorder %s29, 0
        %s334 = scalar_select %p333, %s29, 0
        %s335 = sadd.s32 %s334, %s332
        %s336 = smul.addr %s335, 8
        %s337 = scalar_lea.vmem %s0, %s336
        %p338 = pneg %p65
        %p339 = pneg %p62
        %p340 = scmp.lt.s32.totalorder %s28, 1
        %s341 = scalar_select %p340, %s28, 1
        %s342 = smul.addr %s341, 2
        %s343 = smul.addr %s342, 4
        %s344 = scalar_lea.vmem %s1, %s343
        %p345 = pneg %p91
        %p346 = pneg %p88
        %p347 = pneg %p112
        %p348 = pneg %p109
        %p349 = pneg %p133
        %p350 = pneg %p130
        %p351 = pneg %p154
        %p352 = pneg %p151
        %p353 = pneg %p175
        %p354 = pneg %p172
        %p355 = pneg %p196
        %p356 = pneg %p193
        %p357 = pneg %p217
        %p358 = pneg %p214
        %p359 = pneg %p238
        %p360 = pneg %p235
        %p361 = pneg %p266
        %p362 = pneg %p263
        %s363 = sand.u32 %s253, 1
        %s364 = scalar_lea.sflag [#allocation7], %s363
        %s365 = sand.u32 %s253, 1
        %s366 = smul.addr %s365, 8
        %s367 = scalar_lea.vmem [#allocation6], %s366
        %p368 = scmp.lt.s32.totalorder %s28, 1
        %s369 = scalar_select %p368, %s28, 1
        %p370 = scmp.lt.s32.totalorder %s29, 0
        %s371 = scalar_select %p370, %s29, 0
        %s372 = sadd.s32 %s371, %s369
        %s373 = smul.addr %s372, 8
        %s374 = scalar_lea.vmem %s0, %s373
        %p375 = scmp.lt.s32.totalorder %s28, 1
        %s376 = scalar_select %p375, %s28, 1
        %s377 = smul.addr %s376, 2
        %s378 = smul.addr %s377, 4
        %s379 = scalar_lea.vmem %s1, %s378
        %p381 = scmp.eq.s32.totalorder %s30, 0
        // Predicated region
        $region57: #{tpu_custom_call.1} parent=55 // pred_check
          %p382 = pneg %p381
        $region58: #{tpu_custom_call.1} parent=55 // pred_check_branch
          %384 = sbr.rel (%p382) target = $region60
        $region59: #{tpu_custom_call.1} parent=55 // pred_region
          %v385 = vld [vmem:[%s374] sm:$0xff]
          %v386 = vmul.f32 %v385, %v385
          %vm387 = vcmask 261120
          %v388 = vsel %vm387, %v386, 0.0
          %389 = vadd.xlane.f32.xlu0 %v388
          %v390 = vpop.xlane.xlu0 %389
          %v391 = vrcp.pop 32.0
          %v392 = vmul.f32 %v390, %v391
          %v393 = vadd.f32 %v392, 1e-05
          %v394 = vrsqrt.pop %v393
          %v395 = vmul.f32 %v385, %v394
          %v396 = vld [vmem:[%s2] sm:$0x1]
          %v398 = vlaneseq
          %v399 = vshrl.u32 %v398, 7
          %v400 = vsub.s32 0, %v399
          %v401 = vrot.slane %v396, %v400
          %v403 = vmul.f32 %v395, %v401
          %v404 = vpack.c.bf16 %v403, %v403
          %vm405 = vcmask 257024
          %406 = vst.msk [vmem:[#allocation2] sm:$0xf] %vm405, %v404
          %407 = vst.msk [vmem:[#allocation5] sm:$0xff] %vm387, 0.0
        $region60: #{tpu_custom_call.1} parent=55 // pred_fallthru
          _
        %s408 = smul.u32 %s30, 4
        %s409 = scalar_lea.vmem %s7, %s408
        %v410 = vld [vmem:[%s409] sm:$0x7]
        %p411 = scmp.eq.s32.totalorder %s29, 0
        // Predicated region
        $region61: #{tpu_custom_call.1} parent=55 // pred_check
          %p412 = pneg %p411
        $region62: #{tpu_custom_call.1} parent=55 // pred_check_branch
          %414 = sbr.rel (%p412) target = $region64
        $region63: #{tpu_custom_call.1} parent=55 // pred_region
          %v415 = vld [vmem:[%s379] sm:$0xf]
          %v416 = vld [vmem:[%s379 + $0x4] sm:$0xf]
          %s417 = smul.addr %s408, 4
          %s418 = scalar_lea.vmem %s4, %s417
          %v419 = vld [vmem:[%s418] sm:$0xf]
          %v420 = vld [vmem:[%s418 + $0x4] sm:$0xf]
          %v421 = vld [vmem:[%s418 + $0x8] sm:$0xf]
          %v422 = vld [vmem:[%s418 + $0xc] sm:$0xf]
          %v423 = vlaneseq
          %v424 = vshrl.u32 %v423, 7
          %v425 = vsub.s32 1, %v424
          %v426 = vrot.slane %v410, %v425
          %v429 = vunpack.c.l.b16 %v415
          %v430 = vunpack.c.l.b16 %v416
          %v431 = vpack.c.b16 %v430, %v429
          %v436 = vunpack.c.l.b16 %v419
          %v437 = vunpack.c.l.b16 %v420
          %v438 = vunpack.c.l.b16 %v421
          %v439 = vunpack.c.l.b16 %v422
          %v440 = vpack.c.b16 %v437, %v436
          %v441 = vpack.c.b16 %v439, %v438
          %vm444 = vcmask 261120
          %v446 = vsel %vm444, %v431, 0
          %448 = vmatprep.subr.bf16.mxu0 0
          %449 = vmatpush1.bf16.msra.mxu0 %v440
          %450 = vmatprep.subr.bf16.mxu0 0
          %451 = vmatpush1.bf16.msra.mxu0 %v441
          %452 = vmatprep.subr.bf16.mxu0 0
          %453 = vmatpush1.bf16.msra.mxu0 0
          %454 = vmatprep.subr.bf16.mxu0 0
          %455 = vmatpush1.bf16.msra.mxu0 0
          %456 = vmatprep.subr.bf16.mxu0 0
          %457 = vmatpush1.bf16.msra.mxu0 0
          %458 = vmatprep.subr.bf16.mxu0 0
          %459 = vmatpush1.bf16.msra.mxu0 0
          %460 = vmatprep.subr.bf16.mxu0 0
          %461 = vmatpush1.bf16.msra.mxu0 0
          %462 = vmatprep.subr.bf16.mxu0 0
          %463 = vmatpush1.bf16.msra.mxu0 0
          %464 = vmatprep.subr.bf16.mxu0 0
          %465 = vmatpush1.bf16.msra.mxu0 0
          %466 = vmatprep.subr.bf16.mxu0 0
          %467 = vmatpush1.bf16.msra.mxu0 0
          %468 = vmatprep.subr.bf16.mxu0 0
          %469 = vmatpush1.bf16.msra.mxu0 0
          %470 = vmatprep.subr.bf16.mxu0 0
          %471 = vmatpush1.bf16.msra.mxu0 0
          %472 = vmatprep.subr.bf16.mxu0 0
          %473 = vmatpush1.bf16.msra.mxu0 0
          %474 = vmatprep.subr.bf16.mxu0 0
          %475 = vmatpush1.bf16.msra.mxu0 0
          %476 = vmatprep.subr.bf16.mxu0 0
          %477 = vmatpush1.bf16.msra.mxu0 0
          %478 = vmatprep.subr.bf16.mxu0 0
          %479 = vmatpush1.bf16.msra.mxu0 0
          %480 = vmatprep.mubr.bf16.mxu0 0
          %481 = vmatmul.mubr.bf16.gmra.mrb[0].mxu0 %v446
          %v482 = vpop.f32.mrb[0].mxu0
          %v483 = vadd.f32 %v426, %v482
          %v484 = vpop.f32.mrb[0].mxu0
          %v485 = vpop.f32.mrb[0].mxu0
          %v486 = vadd.f32 %v426, %v485
          %v487 = vpop.f32.mrb[0].mxu0
          %488 = vdwg.mxu0
          %s489 = smul.addr %s408, 4
          %s490 = scalar_lea.vmem %s5, %s489
          %v491 = vld [vmem:[%s490] sm:$0xf]
          %v492 = vld [vmem:[%s490 + $0x4] sm:$0xf]
          %v493 = vld [vmem:[%s490 + $0x8] sm:$0xf]
          %v494 = vld [vmem:[%s490 + $0xc] sm:$0xf]
          %v495 = vlaneseq
          %v496 = vshrl.u32 %v495, 7
          %v497 = vsub.s32 2, %v496
          %v498 = vrot.slane %v410, %v497
          %v503 = vunpack.c.l.b16 %v491
          %v504 = vunpack.c.l.b16 %v492
          %v505 = vunpack.c.l.b16 %v493
          %v506 = vunpack.c.l.b16 %v494
          %v507 = vpack.c.b16 %v504, %v503
          %v508 = vpack.c.b16 %v506, %v505
          %511 = vmatprep.subr.bf16.mxu0 0
          %512 = vmatpush1.bf16.msra.mxu0 %v507
          %513 = vmatprep.subr.bf16.mxu0 0
          %514 = vmatpush1.bf16.msra.mxu0 %v508
          %515 = vmatprep.subr.bf16.mxu0 0
          %516 = vmatpush1.bf16.msra.mxu0 0
          %517 = vmatprep.subr.bf16.mxu0 0
          %518 = vmatpush1.bf16.msra.mxu0 0
          %519 = vmatprep.subr.bf16.mxu0 0
          %520 = vmatpush1.bf16.msra.mxu0 0
          %521 = vmatprep.subr.bf16.mxu0 0
          %522 = vmatpush1.bf16.msra.mxu0 0
          %523 = vmatprep.subr.bf16.mxu0 0
          %524 = vmatpush1.bf16.msra.mxu0 0
          %525 = vmatprep.subr.bf16.mxu0 0
          %526 = vmatpush1.bf16.msra.mxu0 0
          %527 = vmatprep.subr.bf16.mxu0 0
          %528 = vmatpush1.bf16.msra.mxu0 0
          %529 = vmatprep.subr.bf16.mxu0 0
          %530 = vmatpush1.bf16.msra.mxu0 0
          %531 = vmatprep.subr.bf16.mxu0 0
          %532 = vmatpush1.bf16.msra.mxu0 0
          %533 = vmatprep.subr.bf16.mxu0 0
          %534 = vmatpush1.bf16.msra.mxu0 0
          %535 = vmatprep.subr.bf16.mxu0 0
          %536 = vmatpush1.bf16.msra.mxu0 0
          %537 = vmatprep.subr.bf16.mxu0 0
          %538 = vmatpush1.bf16.msra.mxu0 0
          %539 = vmatprep.subr.bf16.mxu0 0
          %540 = vmatpush1.bf16.msra.mxu0 0
          %541 = vmatprep.subr.bf16.mxu0 0
          %542 = vmatpush1.bf16.msra.mxu0 0
          %543 = vmatprep.mubr.bf16.mxu0 0
          %544 = vmatmul.mubr.bf16.gmra.mrb[0].mxu0 %v446
          %v545 = vpop.f32.mrb[0].mxu0
          %v546 = vadd.f32 %v498, %v545
          %v547 = vpop.f32.mrb[0].mxu0
          %v548 = vpop.f32.mrb[0].mxu0
          %v549 = vadd.f32 %v498, %v548
          %v550 = vpop.f32.mrb[0].mxu0
          %551 = vdwg.mxu0
          %v552 = vpack.c.bf16 %v486, %v483
          %s553 = smul.addr %s30, 8
          %s554 = scalar_lea.vmem [#allocation3], %s553
          %vm555 = vcmask 64512
          %556 = vst.msk [vmem:[%s554] sm:$0xff] %vm555, %v552
          %v557 = vpack.c.bf16 %v549, %v546
          %s558 = smul.addr %s30, 8
          %s559 = scalar_lea.vmem [#allocation4], %s558
          %560 = vst.msk [vmem:[%s559] sm:$0xff] %vm555, %v557
        $region64: #{tpu_custom_call.1} parent=55 // pred_fallthru
          _
        %v561 = vld [vmem:[#allocation2] sm:$0xf]
        %s562 = smul.addr %s408, 4
        %s563 = scalar_lea.vmem %s3, %s562
        %v564 = vld [vmem:[%s563] sm:$0xf]
        %v565 = vld [vmem:[%s563 + $0x4] sm:$0xf]
        %v566 = vld [vmem:[%s563 + $0x8] sm:$0xf]
        %v567 = vld [vmem:[%s563 + $0xc] sm:$0xf]
        %v568 = vlaneseq
        %v569 = vshrl.u32 %v568, 7
        %v570 = vsub.s32 0, %v569
        %v571 = vrot.slane %v410, %v570
        %v576 = vunpack.c.l.b16 %v564
        %v577 = vunpack.c.l.b16 %v565
        %v578 = vunpack.c.l.b16 %v566
        %v579 = vunpack.c.l.b16 %v567
        %v580 = vpack.c.b16 %v577, %v576
        %v581 = vpack.c.b16 %v579, %v578
        %vm584 = vcmask 261120
        %v586 = vsel %vm584, %v561, 0
        %588 = vmatprep.subr.bf16.mxu0 0
        %589 = vmatpush1.bf16.msra.mxu0 %v580
        %590 = vmatprep.subr.bf16.mxu0 0
        %591 = vmatpush1.bf16.msra.mxu0 %v581
        %592 = vmatprep.subr.bf16.mxu0 0
        %593 = vmatpush1.bf16.msra.mxu0 0
        %594 = vmatprep.subr.bf16.mxu0 0
        %595 = vmatpush1.bf16.msra.mxu0 0
        %596 = vmatprep.subr.bf16.mxu0 0
        %597 = vmatpush1.bf16.msra.mxu0 0
        %598 = vmatprep.subr.bf16.mxu0 0
        %599 = vmatpush1.bf16.msra.mxu0 0
        %600 = vmatprep.subr.bf16.mxu0 0
        %601 = vmatpush1.bf16.msra.mxu0 0
        %602 = vmatprep.subr.bf16.mxu0 0
        %603 = vmatpush1.bf16.msra.mxu0 0
        %604 = vmatprep.subr.bf16.mxu0 0
        %605 = vmatpush1.bf16.msra.mxu0 0
        %606 = vmatprep.subr.bf16.mxu0 0
        %607 = vmatpush1.bf16.msra.mxu0 0
        %608 = vmatprep.subr.bf16.mxu0 0
        %609 = vmatpush1.bf16.msra.mxu0 0
        %610 = vmatprep.subr.bf16.mxu0 0
        %611 = vmatpush1.bf16.msra.mxu0 0
        %612 = vmatprep.subr.bf16.mxu0 0
        %613 = vmatpush1.bf16.msra.mxu0 0
        %614 = vmatprep.subr.bf16.mxu0 0
        %615 = vmatpush1.bf16.msra.mxu0 0
        %616 = vmatprep.subr.bf16.mxu0 0
        %617 = vmatpush1.bf16.msra.mxu0 0
        %618 = vmatprep.subr.bf16.mxu0 0
        %619 = vmatpush1.bf16.msra.mxu0 0
        %620 = vmatprep.mubr.bf16.mxu0 0
        %621 = vmatmul.mubr.bf16.gmra.mrb[0].mxu0 %v586
        %v622 = vpop.f32.mrb[0].mxu0
        %v623 = vadd.f32 %v571, %v622
        %v624 = vpop.f32.mrb[0].mxu0
        %v625 = vpop.f32.mrb[0].mxu0
        %v626 = vpop.f32.mrb[0].mxu0
        %627 = vdwg.mxu0
        %v628 = vpack.c.bf16 %v623, %v623
        %s629 = smul.addr %s30, 8
        %s630 = scalar_lea.vmem [#allocation3], %s629
        %v631 = vld [vmem:[%s630] sm:$0xff]
        %s632 = smul.addr %s30, 8
        %s633 = scalar_lea.vmem [#allocation4], %s632
        %v634 = vld [vmem:[%s633] sm:$0xff]
        %vm635 = vcmask 64512
        %v637 = vsel %vm635, %v628, 0
        %v640 = vsel %vm635, %v631, 0
        %642 = vmatprep.subr.bf16.mxu0 0
        %643 = vmatpush1.bf16.xpose.msra.mxu0 %v640
        %644 = vmatprep.subr.bf16.mxu0 0
        %645 = vmatpush1.bf16.xpose.msra.mxu0 0
        %646 = vmatprep.subr.bf16.mxu0 0
        %647 = vmatpush1.bf16.xpose.msra.mxu0 0
        %648 = vmatprep.subr.bf16.mxu0 0
        %649 = vmatpush1.bf16.xpose.msra.mxu0 0
        %650 = vmatprep.subr.bf16.mxu0 0
        %651 = vmatpush1.bf16.xpose.msra.mxu0 0
        %652 = vmatprep.subr.bf16.mxu0 0
        %653 = vmatpush1.bf16.xpose.msra.mxu0 0
        %654 = vmatprep.subr.bf16.mxu0 0
        %655 = vmatpush1.bf16.xpose.msra.mxu0 0
        %656 = vmatprep.subr.bf16.mxu0 0
        %657 = vmatpush1.bf16.xpose.msra.mxu0 0
        %658 = vmatprep.subr.bf16.mxu0 0
        %659 = vmatpush1.bf16.xpose.msra.mxu0 0
        %660 = vmatprep.subr.bf16.mxu0 0
        %661 = vmatpush1.bf16.xpose.msra.mxu0 0
        %662 = vmatprep.subr.bf16.mxu0 0
        %663 = vmatpush1.bf16.xpose.msra.mxu0 0
        %664 = vmatprep.subr.bf16.mxu0 0
        %665 = vmatpush1.bf16.xpose.msra.mxu0 0
        %666 = vmatprep.subr.bf16.mxu0 0
        %667 = vmatpush1.bf16.xpose.msra.mxu0 0
        %668 = vmatprep.subr.bf16.mxu0 0
        %669 = vmatpush1.bf16.xpose.msra.mxu0 0
        %670 = vmatprep.subr.bf16.mxu0 0
        %671 = vmatpush1.bf16.xpose.msra.mxu0 0
        %672 = vmatprep.subr.bf16.mxu0 0
        %673 = vmatpush1.bf16.xpose.msra.mxu0 0
        %674 = vmatprep.mubr.bf16.mxu0 0
        %675 = vmatmul.mubr.bf16.gmra.mrb[0].mxu0 %v637
        %v676 = vpop.f32.mrb[0].mxu0
        %v677 = vadd.f32 0.0, %v676
        %v678 = vpop.f32.mrb[0].mxu0
        %v679 = vpop.f32.mrb[0].mxu0
        %v680 = vpop.f32.mrb[0].mxu0
        %681 = vdwg.mxu0
        %vm682 = vcmask 130048
        %v683 = vsel %vm682, %v677, -inf
        %684 = vmax.xlane.f32.xlu0 %v683
        %v685 = vpop.xlane.xlu0 %684
        %v686 = vsub.f32 %v677, %v685
        %v687 = vmul.f32 %v686, 1.442695
        %v688 = vpow.pop %v687
        %v689 = vsel %vm682, %v688, 0.0
        %690 = vadd.xlane.f32.xlu0 %v689
        %v691 = vpop.xlane.xlu0 %690
        %v692 = vpack.c.bf16 %v688, %v688
        %v694 = vsel %vm682, %v692, 0
        %696 = vmatprep.subr.bf16.mxu0 0
        %697 = vmatpush1.bf16.msra.mxu0 %v634
        %698 = vmatprep.subr.bf16.mxu0 0
        %699 = vmatpush1.bf16.msra.mxu0 0
        %700 = vmatprep.subr.bf16.mxu0 0
        %701 = vmatpush1.bf16.msra.mxu0 0
        %702 = vmatprep.subr.bf16.mxu0 0
        %703 = vmatpush1.bf16.msra.mxu0 0
        %704 = vmatprep.subr.bf16.mxu0 0
        %705 = vmatpush1.bf16.msra.mxu0 0
        %706 = vmatprep.subr.bf16.mxu0 0
        %707 = vmatpush1.bf16.msra.mxu0 0
        %708 = vmatprep.subr.bf16.mxu0 0
        %709 = vmatpush1.bf16.msra.mxu0 0
        %710 = vmatprep.subr.bf16.mxu0 0
        %711 = vmatpush1.bf16.msra.mxu0 0
        %712 = vmatprep.subr.bf16.mxu0 0
        %713 = vmatpush1.bf16.msra.mxu0 0
        %714 = vmatprep.subr.bf16.mxu0 0
        %715 = vmatpush1.bf16.msra.mxu0 0
        %716 = vmatprep.subr.bf16.mxu0 0
        %717 = vmatpush1.bf16.msra.mxu0 0
        %718 = vmatprep.subr.bf16.mxu0 0
        %719 = vmatpush1.bf16.msra.mxu0 0
        %720 = vmatprep.subr.bf16.mxu0 0
        %721 = vmatpush1.bf16.msra.mxu0 0
        %722 = vmatprep.subr.bf16.mxu0 0
        %723 = vmatpush1.bf16.msra.mxu0 0
        %724 = vmatprep.subr.bf16.mxu0 0
        %725 = vmatpush1.bf16.msra.mxu0 0
        %726 = vmatprep.subr.bf16.mxu0 0
        %727 = vmatpush1.bf16.msra.mxu0 0
        %728 = vmatprep.mubr.bf16.mxu0 0
        %729 = vmatmul.mubr.bf16.gmra.mrb[0].mxu0 %v694
        %v730 = vpop.f32.mrb[0].mxu0
        %v731 = vadd.f32 0.0, %v730
        %v732 = vpop.f32.mrb[0].mxu0
        %v733 = vpop.f32.mrb[0].mxu0
        %v734 = vpop.f32.mrb[0].mxu0
        %735 = vdwg.mxu0
        %v736 = vrcp.pop %v691
        %v737 = vmul.f32 %v731, %v736
        %v738 = vld [vmem:[#allocation5] sm:$0xff]
        %v739 = vpack.c.bf16 %v737, %v737
        %s740 = smul.addr %s30, 4
        %s741 = scalar_lea.vmem %s6, %s740
        %v742 = vld [vmem:[%s741] sm:$0xf]
        %v744 = vsel %vm635, %v739, 0
        %vm746 = vcmask 1043456
        %v748 = vsel %vm746, %v742, 0
        %750 = vmatprep.subr.bf16.mxu0 0
        %751 = vmatpush1.bf16.msra.mxu0 %v748
        %752 = vmatprep.subr.bf16.mxu0 0
        %753 = vmatpush1.bf16.msra.mxu0 0
        %754 = vmatprep.subr.bf16.mxu0 0
        %755 = vmatpush1.bf16.msra.mxu0 0
        %756 = vmatprep.subr.bf16.mxu0 0
        %757 = vmatpush1.bf16.msra.mxu0 0
        %758 = vmatprep.subr.bf16.mxu0 0
        %759 = vmatpush1.bf16.msra.mxu0 0
        %760 = vmatprep.subr.bf16.mxu0 0
        %761 = vmatpush1.bf16.msra.mxu0 0
        %762 = vmatprep.subr.bf16.mxu0 0
        %763 = vmatpush1.bf16.msra.mxu0 0
        %764 = vmatprep.subr.bf16.mxu0 0
        %765 = vmatpush1.bf16.msra.mxu0 0
        %766 = vmatprep.subr.bf16.mxu0 0
        %767 = vmatpush1.bf16.msra.mxu0 0
        %768 = vmatprep.subr.bf16.mxu0 0
        %769 = vmatpush1.bf16.msra.mxu0 0
        %770 = vmatprep.subr.bf16.mxu0 0
        %771 = vmatpush1.bf16.msra.mxu0 0
        %772 = vmatprep.subr.bf16.mxu0 0
        %773 = vmatpush1.bf16.msra.mxu0 0
        %774 = vmatprep.subr.bf16.mxu0 0
        %775 = vmatpush1.bf16.msra.mxu0 0
        %776 = vmatprep.subr.bf16.mxu0 0
        %777 = vmatpush1.bf16.msra.mxu0 0
        %778 = vmatprep.subr.bf16.mxu0 0
        %779 = vmatpush1.bf16.msra.mxu0 0
        %780 = vmatprep.subr.bf16.mxu0 0
        %781 = vmatpush1.bf16.msra.mxu0 0
        %782 = vmatprep.mubr.bf16.mxu0 0
        %783 = vmatmul.mubr.bf16.gmra.mrb[0].mxu0 %v744
        %v784 = vpop.f32.mrb[0].mxu0
        %v785 = vadd.f32 0.0, %v784
        %v786 = vpop.f32.mrb[0].mxu0
        %v787 = vpop.f32.mrb[0].mxu0
        %v788 = vpop.f32.mrb[0].mxu0
        %789 = vdwg.mxu0
        %v790 = vadd.f32 %v738, %v785
        %791 = vst.msk [vmem:[#allocation5] sm:$0xff] %vm584, %v790
        %p792 = scmp.eq.s32.totalorder %s30, 3
        // Predicated region
        $region65: #{tpu_custom_call.1} parent=55 // pred_check
          %p793 = pneg %p792
        $region66: #{tpu_custom_call.1} parent=55 // pred_check_branch
          %795 = sbr.rel (%p793) target = $region68
        $region67: #{tpu_custom_call.1} parent=55 // pred_region
          %v796 = vld [vmem:[#allocation5] sm:$0xff]
          %v797 = vld [vmem:[%s8] sm:$0x1]
          %v799 = vlaneseq
          %v800 = vshrl.u32 %v799, 7
          %v801 = vsub.s32 0, %v800
          %v802 = vrot.slane %v797, %v801
          %v804 = vadd.f32 %v796, %v802
          %805 = vst.msk [vmem:[%s367] sm:$0xff] %vm584, %v804
        $region68: #{tpu_custom_call.1} parent=55 // pred_fallthru
          _
        %s806 = sand.u32 %s253, 1
        %s807 = scalar_lea.sflag [#allocation7], %s806
        %s808 = sand.u32 %s253, 1
        %s809 = smul.addr %s808, 8
        %s810 = scalar_lea.vmem [#allocation6], %s809
        // Predicated region
        $region69: #{tpu_custom_call.1} parent=55 // pred_check
          %p811 = pneg %p263
        $region70: #{tpu_custom_call.1} parent=55 // pred_check_branch
          %813 = sbr.rel (%p811) target = $region72
        $region71: #{tpu_custom_call.1} parent=55 // pred_region
          %s815 = ssub.s32 128, 128
          %816 = vsyncadd %s807, %s815
          %s817 = sadd.s32 %s29, %s28
          %s818 = smul.addr %s817, 128
          %s819 = scalar_lea.hbm %s9, %s818
          %s821 = sshll.u32 %s810, 4
          %s822 = int_to_ptr.vmem [resolvable:$true] %s821
          %824 = dma.vmem_to_hbm [thread:$0]  %s822, 128, %s819, %s807
        $region72: #{tpu_custom_call.1} parent=55 // pred_fallthru
          _
      $region56: #{tpu_custom_call.1} parent=5 // pred_fallthru
        _
      %p825 = scmp.le.s32.totalorder 2, %s18
      // Predicated region
      $region73: #{tpu_custom_call.1} parent=5 // pred_check
        %p826 = pneg %p825
      $region74: #{tpu_custom_call.1} parent=5 // pred_check_branch
        %828 = sbr.rel (%p826) target = $region76
      $region75: #{tpu_custom_call.1} parent=5 // pred_region
        %s829 = ssub.s32 %s18, 2
        // Predicated region
        $region77: #{tpu_custom_call.1} parent=75 // pred_check
          %p830 = pneg %p269
        $region78: #{tpu_custom_call.1} parent=75 // pred_check_branch
          %832 = sbr.rel (%p830) target = $region80
        $region79: #{tpu_custom_call.1} parent=75 // pred_region
          %s833 = sand.u32 %s254, 1
          %s834 = scalar_lea.sflag [#allocation7], %s833
          %s835 = sand.u32 %s254, 1
          %s836 = smul.addr %s835, 8
          %s837 = scalar_lea.vmem [#allocation6], %s836
          %838 = dma.done %s834, 128
        $region80: #{tpu_custom_call.1} parent=75 // pred_fallthru
          _
      $region76: #{tpu_custom_call.1} parent=5 // pred_fallthru
        _
    $region6: #{tpu_custom_call.1} parent=1 // loop_footer
      %s22 = sadd.s32 1, %s18
    $region7: #{tpu_custom_call.1} parent=1 // loop_footer_branch
      %17 = sbr.rel target = $region3
    $region8: #{tpu_custom_call.1} parent=1 // loop_exit
      _
    %839 = vsyncpa [#allocation7], 1
    %s840 = scalar_lea.sflag [#allocation7], 1
    %841 = vsyncpa %s840, 1

</llo_original>
